<compile_context>
chip_gen: v5e
topology: v5e:2x2
jax: 0.10.0
libtpu: 0.0.40
codegen_flags: <defaults>
</compile_context>

<pallas_src>
import functools

import jax
import jax.numpy as jnp
from jax.experimental import pallas as pl
from jax.experimental.pallas import tpu as pltpu

_LANE = 128
_MIB = 1024 * 1024


def _sigmoid(x):
    # sigmoid(x) == 0.5 * tanh(0.5 * x) + 0.5 : guaranteed single EUP push per element
    # (jax.nn.sigmoid may lower to exp + reciprocal = two EUP pushes).
    return 0.5 * jnp.tanh(0.5 * x) + 0.5


def _vmem_budget_bytes():
    """Generation-aware VMEM budget: ~7/8 of capacity (≈56 MiB v7x, ≈112 MiB v5e/v6e)."""
    try:
        cap = int(pltpu.get_tpu_info().vmem_capacity_bytes)
    except Exception:
        cap = 64 * _MIB  # conservative default: v7x per-TensorCore VMEM
    return (cap // 8) * 7


def prepare_update_layer_params(weight, bias, *, param_dtype=jnp.bfloat16):
    """One-time restructuring of nn.Linear(2E, 3E) params (done at init, not per call).

    weight: (3E, 2E), bias: (3E,).  The forward computes x @ weight.T + bias with
    x = [V_pre | embedded_info], so we store weight.T split into the V_pre half
    (rows [0, E)) and the embedded_info half (rows [E, 2E)).

      * E % 128 == 0 -> "wide" layout:    wv, we: (E, 3E) bf16, b: (1, 3E) f32.
        Kernel issues two wide N=3E MXU dots and takes lane-aligned gate slices.
      * otherwise    -> "per-gate" layout: wv, we: (3, E, E) bf16, b: (3, 1, E) f32.
        No lane-unaligned slicing is ever required (small-E path).
    """
    three_e, two_e = weight.shape
    emb = three_e // 3
    assert three_e == 3 * emb and two_e == 2 * emb
    wt = weight.T.astype(param_dtype)                    # (2E, 3E)
    wv, we = wt[:emb, :], wt[emb:, :]                    # (E, 3E) each
    if emb % _LANE == 0:
        return dict(layout="wide", emb=emb, wv=wv, we=we,
                    b=bias.astype(jnp.float32).reshape(1, 3 * emb))
    wv_g = wv.reshape(emb, 3, emb).transpose(1, 0, 2)    # (3, E, E); [g] == W_g[:, :E].T
    we_g = we.reshape(emb, 3, emb).transpose(1, 0, 2)    # (3, E, E); [g] == W_g[:, E:].T
    return dict(layout="per_gate", emb=emb, wv=wv_g, we=we_g,
                b=bias.astype(jnp.float32).reshape(3, 1, emb))


def _pergate_kernel(v_ref, e_ref, wv_ref, we_ref, b_ref, o_ref, *, compute_dtype):
    """Lane-unaligned E: three (tm,E)x(E,E) gate matmuls on resident per-gate weights."""
    v32 = v_ref[...].astype(jnp.float32)                 # (tm, E), reused in the epilogue
    v = v32.astype(compute_dtype)
    e = e_ref[...].astype(compute_dtype)

    def gate(g):
        return (jnp.dot(v, wv_ref[g], preferred_element_type=jnp.float32)
                + jnp.dot(e, we_ref[g], preferred_element_type=jnp.float32)
                + b_ref[g])                              # (1, E) broadcast, f32

    keep = _sigmoid(gate(0))
    upd = _sigmoid(gate(1))
    new = jnp.tanh(gate(2))
    # Epilogue kept in f32 for accuracy/portability (v5e has no bf16 VPU/EUP).
    o_ref[...] = jnp.tanh(v32 * keep + upd * new).astype(o_ref.dtype)


def _wide_kernel(*refs, compute_dtype, has_vfull):
    """Lane-aligned E: two wide (tm,tk)x(tk,3E) dots; optionally K-tiled over E."""
    if has_vfull:
        v_ref, e_ref, vfull_ref, wv_ref, we_ref, b_ref, o_ref, acc_ref = refs
    else:
        v_ref, e_ref, wv_ref, we_ref, b_ref, o_ref, acc_ref = refs
        vfull_ref = v_ref                                # nk == 1: the K tile is all of E
    k = pl.program_id(1)

    @pl.when(k == 0)
    def _():
        acc_ref[...] = jnp.zeros_like(acc_ref)

    vk = v_ref[...].astype(compute_dtype)                # (tm, tk) bf16 -> MXU fast path
    ek = e_ref[...].astype(compute_dtype)
    acc_ref[...] += (jnp.dot(vk, wv_ref[...], preferred_element_type=jnp.float32)
                     + jnp.dot(ek, we_ref[...], preferred_element_type=jnp.float32))

    @pl.when(k == pl.num_programs(1) - 1)
    def _():
        emb = o_ref.shape[1]
        gates = acc_ref[...] + b_ref[...]                # (tm, 3E) f32
        keep = _sigmoid(gates[:, :emb])                  # slices at multiples of 128: free
        upd = _sigmoid(gates[:, emb:2 * emb])
        new = jnp.tanh(gates[:, 2 * emb:])
        v32 = vfull_ref[...].astype(jnp.float32)
        o_ref[...] = jnp.tanh(v32 * keep + upd * new).astype(o_ref.dtype)


def update_layer(v_pre, embedded_info, params, *, tm=None, tk=None,
                 compute_dtype=jnp.bfloat16):
    """V_pre, embedded_info: (bz, E); params from prepare_update_layer_params."""
    bz, emb = v_pre.shape
    assert embedded_info.shape == (bz, emb)
    assert params["emb"] == emb
    wv, we, b = params["wv"], params["we"], params["b"]
    per_gate = params["layout"] == "per_gate"
    w_itemsize = wv.dtype.itemsize
    act_itemsize = v_pre.dtype.itemsize

    budget = _vmem_budget_bytes()

    # ---- K tiling (wide path only): stream the weight in (tk, 3E) slabs when the
    # resident (E, 3E) halves would not fit in ~half of the VMEM budget. ------------
    if per_gate:
        tk = emb
    elif tk is None:
        per_row = 2 * 3 * emb * w_itemsize               # one K-row of (wv, we) together
        max_rows = max(_LANE, (budget // 2) // per_row)
        m = emb // _LANE
        best = 1
        for d in range(1, m + 1):
            if m % d == 0 and d * _LANE <= max_rows:
                best = d
        tk = best * _LANE
    else:
        assert emb % tk == 0 and tk % _LANE == 0, "tk must divide E and be a multiple of 128"
    nk = emb // tk
    has_vfull = (not per_gate) and nk > 1

    # ---- batch tile: biggest power of two (<= 1024 rows) whose working set fits the
    # per-generation VMEM budget (double-buffered activations + resident weights). ---
    if tm is None:
        resident = int(1.5 * 2 * tk * 3 * emb * w_itemsize)   # weight slab(s); 1.5x hedge

        def step_bytes(t):
            n_in_cols = 2 * emb if per_gate else 2 * tk + (emb if has_vfull else 0)
            acc = 0 if per_gate else t * 3 * emb * 4
            return 2 * t * n_in_cols * act_itemsize + 2 * t * emb * act_itemsize + acc

        tm = 1024
        while tm > 128 and resident + step_bytes(tm) > budget:
            tm //= 2
    tm = min(tm, bz)
    if tm < bz and tm % 8:
        tm = max(8, (tm // 8) * 8)            # keep partial-tile sublane dim 8-aligned
    num_m = pl.cdiv(bz, tm)
    # NOTE: a ragged last batch tile reads padded rows; rows are independent so this
    # is safe (padded output rows are dropped by Pallas on writeback).

    cost = pl.CostEstimate(
        flops=2 * bz * (2 * emb) * (3 * emb),            # 12 * bz * E^2
        transcendentals=4 * bz * emb,                    # 3 gate activations + final tanh
        bytes_accessed=int((3 + int(has_vfull)) * bz * emb * act_itemsize
                           + (wv.size + we.size) * w_itemsize + b.size * 4),
    )
    out_shape = jax.ShapeDtypeStruct((bz, emb), v_pre.dtype)

    def build_and_run(resident_mode):
        def res_spec(shape, index_map):
            # Constant-index operands are DMA'd once and stay resident; Buffered(1)
            # turns off their (useless) double buffering to halve their VMEM footprint.
            if resident_mode is None:
                return pl.BlockSpec(shape, index_map)
            return pl.BlockSpec(shape, index_map, pipeline_mode=resident_mode)

        if per_gate:
            grid = (num_m,)
            in_specs = [
                pl.BlockSpec((tm, emb), lambda i: (i, 0)),
                pl.BlockSpec((tm, emb), lambda i: (i, 0)),
                res_spec((3, emb, emb), lambda i: (0, 0, 0)),
                res_spec((3, emb, emb), lambda i: (0, 0, 0)),
                res_spec((3, 1, emb), lambda i: (0, 0, 0)),
            ]
            operands = (v_pre, embedded_info, wv, we, b)
            out_spec = pl.BlockSpec((tm, emb), lambda i: (i, 0))
            scratch = []
            dims = ("parallel",)
            kernel = functools.partial(_pergate_kernel, compute_dtype=compute_dtype)
        else:
            grid = (num_m, nk)
            # Streamed (K-tiled) weights need the default double buffering to overlap DMA.
            w_spec = res_spec if nk == 1 else pl.BlockSpec
            in_specs = [
                pl.BlockSpec((tm, tk), lambda i, k: (i, k)),
                pl.BlockSpec((tm, tk), lambda i, k: (i, k)),
            ]
            operands = [v_pre, embedded_info]
            if has_vfull:
                # Full-E V_pre for the epilogue (the K-tiled view only covers tk columns).
                in_specs.append(pl.BlockSpec((tm, emb), lambda i, k: (i, 0)))
                operands.append(v_pre)
            in_specs += [
                w_spec((tk, 3 * emb), lambda i, k: (k, 0)),
                w_spec((tk, 3 * emb), lambda i, k: (k, 0)),
                res_spec((1, 3 * emb), lambda i, k: (0, 0)),
            ]
            operands += [wv, we, b]
            operands = tuple(operands)
            out_spec = pl.BlockSpec((tm, emb), lambda i, k: (i, 0))
            scratch = [pltpu.VMEM((tm, 3 * emb), jnp.float32)]
            dims = ("parallel", "arbitrary")
            kernel = functools.partial(_wide_kernel, compute_dtype=compute_dtype,
                                       has_vfull=has_vfull)

        return pl.pallas_call(
            kernel,
            out_shape=out_shape,
            grid=grid,
            in_specs=in_specs,
            out_specs=out_spec,
            scratch_shapes=scratch,
            compiler_params=pltpu.CompilerParams(
                dimension_semantics=dims,
                vmem_limit_bytes=int(budget),
            ),
            cost_estimate=cost,
        )(*operands)

    try:
        return build_and_run(pl.Buffered(1))
    except Exception:
        # Fallback if this Pallas version rejects single-buffered pipeline_mode on the
        # resident operands; identical math, just default double-buffered weights.
        return build_and_run(None)


def update_layer_ref(v_pre, embedded_info, weight, bias):
    """Pure-JAX f32 reference matching the PyTorch forward."""
    x = jnp.concatenate([v_pre, embedded_info], axis=1)
    gates = x @ weight.T + bias
    emb = v_pre.shape[1]
    keep = jax.nn.sigmoid(gates[:, :emb])
    upd = jax.nn.sigmoid(gates[:, emb:2 * emb])
    new = jnp.tanh(gates[:, 2 * emb:])
    return jnp.tanh(v_pre * keep + upd * new)


def _run_case(bz, emb, *, tk=None):
    key = jax.random.PRNGKey(0)
    k1, k2, k3, k4 = jax.random.split(key, 4)
    v_pre = jax.random.normal(k1, (bz, emb), dtype=jnp.float32)
    embedded_info = jax.random.normal(k2, (bz, emb), dtype=jnp.float32)

    # nn.Linear(2E, 3E): weight (3E, 2E), bias (3E,)
    bound = 1.0 / jnp.sqrt(2.0 * emb)
    weight = jax.random.uniform(k3, (3 * emb, 2 * emb),
                                minval=-bound, maxval=bound, dtype=jnp.float32)
    bias = jax.random.uniform(k4, (3 * emb,),
                              minval=-bound, maxval=bound, dtype=jnp.float32)

    params = prepare_update_layer_params(weight, bias)   # one-time, at init
    out = jax.block_until_ready(update_layer(v_pre, embedded_info, params, tk=tk))
    ref = update_layer_ref(v_pre, embedded_info, weight, bias)
    assert out.shape == (bz, emb)
    # bf16 MXU operands + bf16-stored weights vs the f32 reference -> loosened tolerance.
    assert jnp.allclose(out, ref, atol=2e-2, rtol=2e-2), \
        f"mismatch vs reference (bz={bz}, emb={emb}, tk={tk})"


if __name__ == "__main__":
    _run_case(8, 32)              # small demo: lane-unaligned E -> per-gate path
    _run_case(16, 128)            # lane-aligned E -> wide N=3E path, resident weight
    _run_case(16, 256, tk=128)    # forced K-tiling -> streamed weight + f32 accumulator
    print("KERNEL_OK")
</pallas_src>

<mosaic_0001>
module attributes {stable_mosaic.version = 11 : i64} {
  func.func @_pergate_kernel(%arg0: i32, %arg1: memref<8x32xf32, #tpu.memory_space<vmem>>, %arg2: memref<8x32xf32, #tpu.memory_space<vmem>>, %arg3: memref<3x32x32xbf16, #tpu.memory_space<vmem>>, %arg4: memref<3x32x32xbf16, #tpu.memory_space<vmem>>, %arg5: memref<3x1x32xf32, #tpu.memory_space<vmem>>, %arg6: memref<8x32xf32, #tpu.memory_space<vmem>>) attributes {dimension_semantics = [#tpu.dimension_semantics<parallel>], iteration_bounds = array<i64: 1>, scalar_prefetch = 0 : i64, scratch_operands = 0 : i64, tpu.core_type = #tpu.core_type<tc>, window_params = [{transform_indices = @transform_0, window_bounds = array<i64: 8, 32>}, {transform_indices = @transform_1, window_bounds = array<i64: 8, 32>}, {pipeline_mode = #tpu.pipeline_mode<synchronous>, transform_indices = @transform_2, window_bounds = array<i64: 3, 32, 32>}, {pipeline_mode = #tpu.pipeline_mode<synchronous>, transform_indices = @transform_3, window_bounds = array<i64: 3, 32, 32>}, {pipeline_mode = #tpu.pipeline_mode<synchronous>, transform_indices = @transform_4, window_bounds = array<i64: 3, 1, 32>}, {transform_indices = @transform_5, window_bounds = array<i64: 8, 32>}]} {
    %c0 = arith.constant 0 : index
    %c0_0 = arith.constant 0 : index
    %0 = vector.load %arg1[%c0, %c0_0] : memref<8x32xf32, #tpu.memory_space<vmem>>, vector<8x32xf32>
    %1 = arith.truncf %0 : vector<8x32xf32> to vector<8x32xbf16>
    %c0_1 = arith.constant 0 : index
    %c0_2 = arith.constant 0 : index
    %2 = vector.load %arg2[%c0_1, %c0_2] : memref<8x32xf32, #tpu.memory_space<vmem>>, vector<8x32xf32>
    %3 = arith.truncf %2 : vector<8x32xf32> to vector<8x32xbf16>
    %c0_3 = arith.constant 0 : index
    %c0_4 = arith.constant 0 : index
    %c0_5 = arith.constant 0 : index
    %4 = vector.load %arg3[%c0_3, %c0_4, %c0_5] : memref<3x32x32xbf16, #tpu.memory_space<vmem>>, vector<1x32x32xbf16>
    %5 = vector.shape_cast %4 : vector<1x32x32xbf16> to vector<32x32xbf16>
    %cst = arith.constant dense<0.000000e+00> : vector<8x32xf32>
    %6 = tpu.matmul %1, %5, %cst {dimension_numbers = #tpu.dot_dimension_numbers<[1], [0], [0], [1], [0, 0, 1, 1], [], []>} : vector<8x32xbf16>, vector<32x32xbf16>, vector<8x32xf32> -> vector<8x32xf32>
    %c0_6 = arith.constant 0 : index
    %c0_7 = arith.constant 0 : index
    %c0_8 = arith.constant 0 : index
    %7 = vector.load %arg4[%c0_6, %c0_7, %c0_8] : memref<3x32x32xbf16, #tpu.memory_space<vmem>>, vector<1x32x32xbf16>
    %8 = vector.shape_cast %7 : vector<1x32x32xbf16> to vector<32x32xbf16>
    %cst_9 = arith.constant dense<0.000000e+00> : vector<8x32xf32>
    %9 = tpu.matmul %3, %8, %cst_9 {dimension_numbers = #tpu.dot_dimension_numbers<[1], [0], [0], [1], [0, 0, 1, 1], [], []>} : vector<8x32xbf16>, vector<32x32xbf16>, vector<8x32xf32> -> vector<8x32xf32>
    %10 = arith.addf %6, %9 : vector<8x32xf32>
    %c0_10 = arith.constant 0 : index
    %c0_11 = arith.constant 0 : index
    %c0_12 = arith.constant 0 : index
    %11 = vector.load %arg5[%c0_10, %c0_11, %c0_12] : memref<3x1x32xf32, #tpu.memory_space<vmem>>, vector<1x1x32xf32>
    %12 = vector.shape_cast %11 : vector<1x1x32xf32> to vector<1x32xf32>
    %13 = vector.broadcast %12 : vector<1x32xf32> to vector<8x32xf32>
    %14 = arith.addf %10, %13 : vector<8x32xf32>
    %cst_13 = arith.constant 5.000000e-01 : f32
    %15 = vector.broadcast %cst_13 : f32 to vector<8x32xf32>
    %16 = arith.mulf %15, %14 : vector<8x32xf32>
    %17 = math.tanh %16 : vector<8x32xf32>
    %cst_14 = arith.constant 5.000000e-01 : f32
    %18 = vector.broadcast %cst_14 : f32 to vector<8x32xf32>
    %19 = arith.mulf %18, %17 : vector<8x32xf32>
    %cst_15 = arith.constant 5.000000e-01 : f32
    %20 = vector.broadcast %cst_15 : f32 to vector<8x32xf32>
    %21 = arith.addf %19, %20 : vector<8x32xf32>
    %c1 = arith.constant 1 : index
    %c0_16 = arith.constant 0 : index
    %c0_17 = arith.constant 0 : index
    %22 = vector.load %arg3[%c1, %c0_16, %c0_17] : memref<3x32x32xbf16, #tpu.memory_space<vmem>>, vector<1x32x32xbf16>
    %23 = vector.shape_cast %22 : vector<1x32x32xbf16> to vector<32x32xbf16>
    %cst_18 = arith.constant dense<0.000000e+00> : vector<8x32xf32>
    %24 = tpu.matmul %1, %23, %cst_18 {dimension_numbers = #tpu.dot_dimension_numbers<[1], [0], [0], [1], [0, 0, 1, 1], [], []>} : vector<8x32xbf16>, vector<32x32xbf16>, vector<8x32xf32> -> vector<8x32xf32>
    %c1_19 = arith.constant 1 : index
    %c0_20 = arith.constant 0 : index
    %c0_21 = arith.constant 0 : index
    %25 = vector.load %arg4[%c1_19, %c0_20, %c0_21] : memref<3x32x32xbf16, #tpu.memory_space<vmem>>, vector<1x32x32xbf16>
    %26 = vector.shape_cast %25 : vector<1x32x32xbf16> to vector<32x32xbf16>
    %cst_22 = arith.constant dense<0.000000e+00> : vector<8x32xf32>
    %27 = tpu.matmul %3, %26, %cst_22 {dimension_numbers = #tpu.dot_dimension_numbers<[1], [0], [0], [1], [0, 0, 1, 1], [], []>} : vector<8x32xbf16>, vector<32x32xbf16>, vector<8x32xf32> -> vector<8x32xf32>
    %28 = arith.addf %24, %27 : vector<8x32xf32>
    %c1_23 = arith.constant 1 : index
    %c0_24 = arith.constant 0 : index
    %c0_25 = arith.constant 0 : index
    %29 = vector.load %arg5[%c1_23, %c0_24, %c0_25] : memref<3x1x32xf32, #tpu.memory_space<vmem>>, vector<1x1x32xf32>
    %30 = vector.shape_cast %29 : vector<1x1x32xf32> to vector<1x32xf32>
    %31 = vector.broadcast %30 : vector<1x32xf32> to vector<8x32xf32>
    %32 = arith.addf %28, %31 : vector<8x32xf32>
    %cst_26 = arith.constant 5.000000e-01 : f32
    %33 = vector.broadcast %cst_26 : f32 to vector<8x32xf32>
    %34 = arith.mulf %33, %32 : vector<8x32xf32>
    %35 = math.tanh %34 : vector<8x32xf32>
    %cst_27 = arith.constant 5.000000e-01 : f32
    %36 = vector.broadcast %cst_27 : f32 to vector<8x32xf32>
    %37 = arith.mulf %36, %35 : vector<8x32xf32>
    %cst_28 = arith.constant 5.000000e-01 : f32
    %38 = vector.broadcast %cst_28 : f32 to vector<8x32xf32>
    %39 = arith.addf %37, %38 : vector<8x32xf32>
    %c2 = arith.constant 2 : index
    %c0_29 = arith.constant 0 : index
    %c0_30 = arith.constant 0 : index
    %40 = vector.load %arg3[%c2, %c0_29, %c0_30] : memref<3x32x32xbf16, #tpu.memory_space<vmem>>, vector<1x32x32xbf16>
    %41 = vector.shape_cast %40 : vector<1x32x32xbf16> to vector<32x32xbf16>
    %cst_31 = arith.constant dense<0.000000e+00> : vector<8x32xf32>
    %42 = tpu.matmul %1, %41, %cst_31 {dimension_numbers = #tpu.dot_dimension_numbers<[1], [0], [0], [1], [0, 0, 1, 1], [], []>} : vector<8x32xbf16>, vector<32x32xbf16>, vector<8x32xf32> -> vector<8x32xf32>
    %c2_32 = arith.constant 2 : index
    %c0_33 = arith.constant 0 : index
    %c0_34 = arith.constant 0 : index
    %43 = vector.load %arg4[%c2_32, %c0_33, %c0_34] : memref<3x32x32xbf16, #tpu.memory_space<vmem>>, vector<1x32x32xbf16>
    %44 = vector.shape_cast %43 : vector<1x32x32xbf16> to vector<32x32xbf16>
    %cst_35 = arith.constant dense<0.000000e+00> : vector<8x32xf32>
    %45 = tpu.matmul %3, %44, %cst_35 {dimension_numbers = #tpu.dot_dimension_numbers<[1], [0], [0], [1], [0, 0, 1, 1], [], []>} : vector<8x32xbf16>, vector<32x32xbf16>, vector<8x32xf32> -> vector<8x32xf32>
    %46 = arith.addf %42, %45 : vector<8x32xf32>
    %c2_36 = arith.constant 2 : index
    %c0_37 = arith.constant 0 : index
    %c0_38 = arith.constant 0 : index
    %47 = vector.load %arg5[%c2_36, %c0_37, %c0_38] : memref<3x1x32xf32, #tpu.memory_space<vmem>>, vector<1x1x32xf32>
    %48 = vector.shape_cast %47 : vector<1x1x32xf32> to vector<1x32xf32>
    %49 = vector.broadcast %48 : vector<1x32xf32> to vector<8x32xf32>
    %50 = arith.addf %46, %49 : vector<8x32xf32>
    %51 = math.tanh %50 : vector<8x32xf32>
    %52 = arith.mulf %0, %21 : vector<8x32xf32>
    %53 = arith.mulf %39, %51 : vector<8x32xf32>
    %54 = arith.addf %52, %53 : vector<8x32xf32>
    %55 = math.tanh %54 : vector<8x32xf32>
    %c0_39 = arith.constant 0 : index
    %c0_40 = arith.constant 0 : index
    %56 = vector.load %arg6[%c0_39, %c0_40] : memref<8x32xf32, #tpu.memory_space<vmem>>, vector<8x32xf32>
    tpu.vector_store %arg6[%c0_39, %c0_40], %55 {strides = array<i32>} : memref<8x32xf32, #tpu.memory_space<vmem>>, vector<8x32xf32>,
    return
  }
  func.func @transform_0(%arg0: i32) -> (i32, i32) {
    %c0_i32 = arith.constant 0 : i32
    %c0_i32_0 = arith.constant 0 : i32
    return %arg0, %c0_i32 : i32, i32
  }
  func.func @transform_1(%arg0: i32) -> (i32, i32) {
    %c0_i32 = arith.constant 0 : i32
    %c0_i32_0 = arith.constant 0 : i32
    return %arg0, %c0_i32 : i32, i32
  }
  func.func @transform_2(%arg0: i32) -> (i32, i32, i32) {
    %c0_i32 = arith.constant 0 : i32
    %c0_i32_0 = arith.constant 0 : i32
    %c0_i32_1 = arith.constant 0 : i32
    %c0_i32_2 = arith.constant 0 : i32
    return %c0_i32, %c0_i32_0, %c0_i32_1 : i32, i32, i32
  }
  func.func @transform_3(%arg0: i32) -> (i32, i32, i32) {
    %c0_i32 = arith.constant 0 : i32
    %c0_i32_0 = arith.constant 0 : i32
    %c0_i32_1 = arith.constant 0 : i32
    %c0_i32_2 = arith.constant 0 : i32
    return %c0_i32, %c0_i32_0, %c0_i32_1 : i32, i32, i32
  }
  func.func @transform_4(%arg0: i32) -> (i32, i32, i32) {
    %c0_i32 = arith.constant 0 : i32
    %c0_i32_0 = arith.constant 0 : i32
    %c0_i32_1 = arith.constant 0 : i32
    %c0_i32_2 = arith.constant 0 : i32
    return %c0_i32, %c0_i32_0, %c0_i32_1 : i32, i32, i32
  }
  func.func @transform_5(%arg0: i32) -> (i32, i32) {
    %c0_i32 = arith.constant 0 : i32
    %c0_i32_0 = arith.constant 0 : i32
    return %arg0, %c0_i32 : i32, i32
  }
}

module attributes {stable_mosaic.version = 11 : i64} {
  func.func @_pergate_kernel(%arg0: i32, %arg1: memref<8x32xf32, #tpu.memory_space<vmem>>, %arg2: memref<8x32xf32, #tpu.memory_space<vmem>>, %arg3: memref<3x32x32xbf16, #tpu.memory_space<vmem>>, %arg4: memref<3x32x32xbf16, #tpu.memory_space<vmem>>, %arg5: memref<3x1x32xf32, #tpu.memory_space<vmem>>, %arg6: memref<8x32xf32, #tpu.memory_space<vmem>>) attributes {dimension_semantics = [#tpu.dimension_semantics<parallel>], iteration_bounds = array<i64: 1>, scalar_prefetch = 0 : i64, scratch_operands = 0 : i64, tpu.core_type = #tpu.core_type<tc>, window_params = [{transform_indices = @transform_0, window_bounds = array<i64: 8, 32>}, {transform_indices = @transform_1, window_bounds = array<i64: 8, 32>}, {pipeline_mode = #tpu.pipeline_mode<synchronous>, transform_indices = @transform_2, window_bounds = array<i64: 3, 32, 32>}, {pipeline_mode = #tpu.pipeline_mode<synchronous>, transform_indices = @transform_3, window_bounds = array<i64: 3, 32, 32>}, {pipeline_mode = #tpu.pipeline_mode<synchronous>, transform_indices = @transform_4, window_bounds = array<i64: 3, 1, 32>}, {transform_indices = @transform_5, window_bounds = array<i64: 8, 32>}]} {
    %c0 = arith.constant 0 : index
    %c0_0 = arith.constant 0 : index
    %0 = vector.load %arg1[%c0, %c0_0] : memref<8x32xf32, #tpu.memory_space<vmem>>, vector<8x32xf32>
    %1 = arith.truncf %0 : vector<8x32xf32> to vector<8x32xbf16>
    %c0_1 = arith.constant 0 : index
    %c0_2 = arith.constant 0 : index
    %2 = vector.load %arg2[%c0_1, %c0_2] : memref<8x32xf32, #tpu.memory_space<vmem>>, vector<8x32xf32>
    %3 = arith.truncf %2 : vector<8x32xf32> to vector<8x32xbf16>
    %c0_3 = arith.constant 0 : index
    %c0_4 = arith.constant 0 : index
    %c0_5 = arith.constant 0 : index
    %4 = vector.load %arg3[%c0_3, %c0_4, %c0_5] : memref<3x32x32xbf16, #tpu.memory_space<vmem>>, vector<1x32x32xbf16>
    %5 = vector.shape_cast %4 : vector<1x32x32xbf16> to vector<32x32xbf16>
    %cst = arith.constant dense<0.000000e+00> : vector<8x32xf32>
    %6 = tpu.matmul %1, %5, %cst {dimension_numbers = #tpu.dot_dimension_numbers<[1], [0], [0], [1], [0, 0, 1, 1], [], []>} : vector<8x32xbf16>, vector<32x32xbf16>, vector<8x32xf32> -> vector<8x32xf32>
    %c0_6 = arith.constant 0 : index
    %c0_7 = arith.constant 0 : index
    %c0_8 = arith.constant 0 : index
    %7 = vector.load %arg4[%c0_6, %c0_7, %c0_8] : memref<3x32x32xbf16, #tpu.memory_space<vmem>>, vector<1x32x32xbf16>
    %8 = vector.shape_cast %7 : vector<1x32x32xbf16> to vector<32x32xbf16>
    %cst_9 = arith.constant dense<0.000000e+00> : vector<8x32xf32>
    %9 = tpu.matmul %3, %8, %cst_9 {dimension_numbers = #tpu.dot_dimension_numbers<[1], [0], [0], [1], [0, 0, 1, 1], [], []>} : vector<8x32xbf16>, vector<32x32xbf16>, vector<8x32xf32> -> vector<8x32xf32>
    %10 = arith.addf %6, %9 : vector<8x32xf32>
    %c0_10 = arith.constant 0 : index
    %c0_11 = arith.constant 0 : index
    %c0_12 = arith.constant 0 : index
    %11 = vector.load %arg5[%c0_10, %c0_11, %c0_12] : memref<3x1x32xf32, #tpu.memory_space<vmem>>, vector<1x1x32xf32>
    %12 = vector.shape_cast %11 : vector<1x1x32xf32> to vector<1x32xf32>
    %13 = vector.broadcast %12 : vector<1x32xf32> to vector<8x32xf32>
    %14 = arith.addf %10, %13 : vector<8x32xf32>
    %cst_13 = arith.constant 5.000000e-01 : f32
    %15 = vector.broadcast %cst_13 : f32 to vector<8x32xf32>
    %16 = arith.mulf %15, %14 : vector<8x32xf32>
    %17 = math.tanh %16 : vector<8x32xf32>
    %cst_14 = arith.constant 5.000000e-01 : f32
    %18 = vector.broadcast %cst_14 : f32 to vector<8x32xf32>
    %19 = arith.mulf %18, %17 : vector<8x32xf32>
    %cst_15 = arith.constant 5.000000e-01 : f32
    %20 = vector.broadcast %cst_15 : f32 to vector<8x32xf32>
    %21 = arith.addf %19, %20 : vector<8x32xf32>
    %c1 = arith.constant 1 : index
    %c0_16 = arith.constant 0 : index
    %c0_17 = arith.constant 0 : index
    %22 = vector.load %arg3[%c1, %c0_16, %c0_17] : memref<3x32x32xbf16, #tpu.memory_space<vmem>>, vector<1x32x32xbf16>
    %23 = vector.shape_cast %22 : vector<1x32x32xbf16> to vector<32x32xbf16>
    %cst_18 = arith.constant dense<0.000000e+00> : vector<8x32xf32>
    %24 = tpu.matmul %1, %23, %cst_18 {dimension_numbers = #tpu.dot_dimension_numbers<[1], [0], [0], [1], [0, 0, 1, 1], [], []>} : vector<8x32xbf16>, vector<32x32xbf16>, vector<8x32xf32> -> vector<8x32xf32>
    %c1_19 = arith.constant 1 : index
    %c0_20 = arith.constant 0 : index
    %c0_21 = arith.constant 0 : index
    %25 = vector.load %arg4[%c1_19, %c0_20, %c0_21] : memref<3x32x32xbf16, #tpu.memory_space<vmem>>, vector<1x32x32xbf16>
    %26 = vector.shape_cast %25 : vector<1x32x32xbf16> to vector<32x32xbf16>
    %cst_22 = arith.constant dense<0.000000e+00> : vector<8x32xf32>
    %27 = tpu.matmul %3, %26, %cst_22 {dimension_numbers = #tpu.dot_dimension_numbers<[1], [0], [0], [1], [0, 0, 1, 1], [], []>} : vector<8x32xbf16>, vector<32x32xbf16>, vector<8x32xf32> -> vector<8x32xf32>
    %28 = arith.addf %24, %27 : vector<8x32xf32>
    %c1_23 = arith.constant 1 : index
    %c0_24 = arith.constant 0 : index
    %c0_25 = arith.constant 0 : index
    %29 = vector.load %arg5[%c1_23, %c0_24, %c0_25] : memref<3x1x32xf32, #tpu.memory_space<vmem>>, vector<1x1x32xf32>
    %30 = vector.shape_cast %29 : vector<1x1x32xf32> to vector<1x32xf32>
    %31 = vector.broadcast %30 : vector<1x32xf32> to vector<8x32xf32>
    %32 = arith.addf %28, %31 : vector<8x32xf32>
    %cst_26 = arith.constant 5.000000e-01 : f32
    %33 = vector.broadcast %cst_26 : f32 to vector<8x32xf32>
    %34 = arith.mulf %33, %32 : vector<8x32xf32>
    %35 = math.tanh %34 : vector<8x32xf32>
    %cst_27 = arith.constant 5.000000e-01 : f32
    %36 = vector.broadcast %cst_27 : f32 to vector<8x32xf32>
    %37 = arith.mulf %36, %35 : vector<8x32xf32>
    %cst_28 = arith.constant 5.000000e-01 : f32
    %38 = vector.broadcast %cst_28 : f32 to vector<8x32xf32>
    %39 = arith.addf %37, %38 : vector<8x32xf32>
    %c2 = arith.constant 2 : index
    %c0_29 = arith.constant 0 : index
    %c0_30 = arith.constant 0 : index
    %40 = vector.load %arg3[%c2, %c0_29, %c0_30] : memref<3x32x32xbf16, #tpu.memory_space<vmem>>, vector<1x32x32xbf16>
    %41 = vector.shape_cast %40 : vector<1x32x32xbf16> to vector<32x32xbf16>
    %cst_31 = arith.constant dense<0.000000e+00> : vector<8x32xf32>
    %42 = tpu.matmul %1, %41, %cst_31 {dimension_numbers = #tpu.dot_dimension_numbers<[1], [0], [0], [1], [0, 0, 1, 1], [], []>} : vector<8x32xbf16>, vector<32x32xbf16>, vector<8x32xf32> -> vector<8x32xf32>
    %c2_32 = arith.constant 2 : index
    %c0_33 = arith.constant 0 : index
    %c0_34 = arith.constant 0 : index
    %43 = vector.load %arg4[%c2_32, %c0_33, %c0_34] : memref<3x32x32xbf16, #tpu.memory_space<vmem>>, vector<1x32x32xbf16>
    %44 = vector.shape_cast %43 : vector<1x32x32xbf16> to vector<32x32xbf16>
    %cst_35 = arith.constant dense<0.000000e+00> : vector<8x32xf32>
    %45 = tpu.matmul %3, %44, %cst_35 {dimension_numbers = #tpu.dot_dimension_numbers<[1], [0], [0], [1], [0, 0, 1, 1], [], []>} : vector<8x32xbf16>, vector<32x32xbf16>, vector<8x32xf32> -> vector<8x32xf32>
    %46 = arith.addf %42, %45 : vector<8x32xf32>
    %c2_36 = arith.constant 2 : index
    %c0_37 = arith.constant 0 : index
    %c0_38 = arith.constant 0 : index
    %47 = vector.load %arg5[%c2_36, %c0_37, %c0_38] : memref<3x1x32xf32, #tpu.memory_space<vmem>>, vector<1x1x32xf32>
    %48 = vector.shape_cast %47 : vector<1x1x32xf32> to vector<1x32xf32>
    %49 = vector.broadcast %48 : vector<1x32xf32> to vector<8x32xf32>
    %50 = arith.addf %46, %49 : vector<8x32xf32>
    %51 = math.tanh %50 : vector<8x32xf32>
    %52 = arith.mulf %0, %21 : vector<8x32xf32>
    %53 = arith.mulf %39, %51 : vector<8x32xf32>
    %54 = arith.addf %52, %53 : vector<8x32xf32>
    %55 = math.tanh %54 : vector<8x32xf32>
    %c0_39 = arith.constant 0 : index
    %c0_40 = arith.constant 0 : index
    %56 = vector.load %arg6[%c0_39, %c0_40] : memref<8x32xf32, #tpu.memory_space<vmem>>, vector<8x32xf32>
    tpu.vector_store %arg6[%c0_39, %c0_40], %55 {strides = array<i32>} : memref<8x32xf32, #tpu.memory_space<vmem>>, vector<8x32xf32>,
    return
  }
  func.func @transform_0(%arg0: i32) -> (i32, i32) {
    %c0_i32 = arith.constant 0 : i32
    %c0_i32_0 = arith.constant 0 : i32
    return %arg0, %c0_i32 : i32, i32
  }
  func.func @transform_1(%arg0: i32) -> (i32, i32) {
    %c0_i32 = arith.constant 0 : i32
    %c0_i32_0 = arith.constant 0 : i32
    return %arg0, %c0_i32 : i32, i32
  }
  func.func @transform_2(%arg0: i32) -> (i32, i32, i32) {
    %c0_i32 = arith.constant 0 : i32
    %c0_i32_0 = arith.constant 0 : i32
    %c0_i32_1 = arith.constant 0 : i32
    %c0_i32_2 = arith.constant 0 : i32
    return %c0_i32, %c0_i32_0, %c0_i32_1 : i32, i32, i32
  }
  func.func @transform_3(%arg0: i32) -> (i32, i32, i32) {
    %c0_i32 = arith.constant 0 : i32
    %c0_i32_0 = arith.constant 0 : i32
    %c0_i32_1 = arith.constant 0 : i32
    %c0_i32_2 = arith.constant 0 : i32
    return %c0_i32, %c0_i32_0, %c0_i32_1 : i32, i32, i32
  }
  func.func @transform_4(%arg0: i32) -> (i32, i32, i32) {
    %c0_i32 = arith.constant 0 : i32
    %c0_i32_0 = arith.constant 0 : i32
    %c0_i32_1 = arith.constant 0 : i32
    %c0_i32_2 = arith.constant 0 : i32
    return %c0_i32, %c0_i32_0, %c0_i32_1 : i32, i32, i32
  }
  func.func @transform_5(%arg0: i32) -> (i32, i32) {
    %c0_i32 = arith.constant 0 : i32
    %c0_i32_0 = arith.constant 0 : i32
    return %arg0, %c0_i32 : i32, i32
  }
}

</mosaic_0001>

<llo_original>
// kernel: tpu_custom_call.1
$region0: #{tpu_custom_call.1}
  #allocation0 [shape = 'u32[]', space=smem, size = 0x4, offset = 0x4, fixed_abs, tag = 'smem constant byte address 0x4 - core index']
  #allocation1 [shape = 'u32[72,128]{1,0:T(1,128)}', space=vmem, size = 0x9000, scoped, tag = 'internal scratch']
  %s0 = inlined_call_operand.hbm [shape: f32[8,32], index: 0, kind: input, shape index: {}]
  %s1 = inlined_call_operand.hbm [shape: f32[8,32], index: 1, kind: input, shape index: {}]
  %s2 = inlined_call_operand.hbm [shape: bf16[3,32,32], index: 2, kind: input, shape index: {}]
  %s3 = inlined_call_operand.hbm [shape: bf16[3,32,32], index: 3, kind: input, shape index: {}]
  %s4 = inlined_call_operand.vmem [shape: f32[3,1,32], index: 4, kind: input, shape index: {}]
  %s5 = inlined_call_operand.hbm [shape: f32[8,32], index: 5, kind: output, shape index: {}]
  %s6 = sld [smem:[#allocation0]]
  $region46: #{tpu_custom_call.1} parent=0
    _
  %s8 = ssub.s32 1, %s6
  %s9 = scalar_select 0, %s8, %s6
  $region1: #{tpu_custom_call.1} parent=0
    #allocation2 [shape = 'u8[4096]{0}', space=vmem, size = 0x1000, scoped, tag = 'input window, operand 0, single buffered']
    #allocation3 [shape = 's32[1]{0}', space=sflag, size = 0x4, scoped, tag = 'scoped memory for tpu_custom_call.1']
    #allocation4 [shape = 's32[1]{0}', space=sflag, size = 0x4, scoped, tag = 'scoped memory for tpu_custom_call.1']
    #allocation5 [shape = 'u8[4096]{0}', space=vmem, size = 0x1000, scoped, tag = 'input window, operand 1, single buffered']
    #allocation6 [shape = 's32[1]{0}', space=sflag, size = 0x4, scoped, tag = 'scoped memory for tpu_custom_call.1']
    #allocation7 [shape = 'u8[24576]{0}', space=vmem, size = 0x6000, scoped, tag = 'input window, operand 2, single buffered']
    #allocation8 [shape = 'u8[24576]{0}', space=vmem, size = 0x6000, scoped, tag = 'input window, operand 3, single buffered']
    #allocation9 [shape = 's32[1]{0}', space=sflag, size = 0x4, scoped, tag = 'scoped memory for tpu_custom_call.1']
    #allocation10 [shape = 'u8[4096]{0}', space=vmem, size = 0x1000, scoped, tag = 'output window, operand 0, single buffered']
    %10 = vsyncpa [#allocation3], 0
    %11 = vsyncpa [#allocation6], 0
    %12 = vsyncpa [#allocation9], 0
    %13 = vsyncpa [#allocation4], 0
    // Predicated region
    $region2: #{tpu_custom_call.1} parent=1 // pred_check
      _
    $region3: #{tpu_custom_call.1} parent=1 // pred_check_branch
      %15 = sbr.rel (0) target = $region5
    $region4: #{tpu_custom_call.1} parent=1 // pred_region
      %17 = vsyncadd [#allocation3], 0
      %s19 = sshll.u32 %s0, 4
      %s20 = int_to_ptr.hbm [resolvable:$true] %s19
      %s21 = sshll.u32 [#allocation2], 4
      %s22 = int_to_ptr.vmem [resolvable:$true] %s21
      %24 = dma.hbm_to_vmem [thread:$0]  %s20, 128, %s22, [#allocation3]
    $region5: #{tpu_custom_call.1} parent=1 // pred_fallthru
      _
    // Predicated region
    $region6: #{tpu_custom_call.1} parent=1 // pred_check
      _
    $region7: #{tpu_custom_call.1} parent=1 // pred_check_branch
      %26 = sbr.rel (0) target = $region9
    $region8: #{tpu_custom_call.1} parent=1 // pred_region
      %28 = vsyncadd [#allocation6], 0
      %s30 = sshll.u32 %s1, 4
      %s31 = int_to_ptr.hbm [resolvable:$true] %s30
      %s32 = sshll.u32 [#allocation5], 4
      %s33 = int_to_ptr.vmem [resolvable:$true] %s32
      %35 = dma.hbm_to_vmem [thread:$0]  %s31, 128, %s33, [#allocation6]
    $region9: #{tpu_custom_call.1} parent=1 // pred_fallthru
      _
    // Predicated region
    $region10: #{tpu_custom_call.1} parent=1 // pred_check
      _
    $region11: #{tpu_custom_call.1} parent=1 // pred_check_branch
      %37 = sbr.rel (0) target = $region13
    $region12: #{tpu_custom_call.1} parent=1 // pred_region
      %39 = vsyncadd [#allocation6], 0
      %s40 = sshll.u32 %s2, 4
      %s41 = int_to_ptr.hbm [resolvable:$true] %s40
      %s42 = sshll.u32 [#allocation7], 4
      %s43 = int_to_ptr.vmem [resolvable:$true] %s42
      %48 = dma.hbm_to_vmem [thread:$0]  %s41, 768, %s43, [#allocation6], 64, 64, 4
    $region13: #{tpu_custom_call.1} parent=1 // pred_fallthru
      _
    // Predicated region
    $region14: #{tpu_custom_call.1} parent=1 // pred_check
      _
    $region15: #{tpu_custom_call.1} parent=1 // pred_check_branch
      %50 = sbr.rel (0) target = $region17
    $region16: #{tpu_custom_call.1} parent=1 // pred_region
      %52 = vsyncadd [#allocation9], 0
      %s53 = sshll.u32 %s3, 4
      %s54 = int_to_ptr.hbm [resolvable:$true] %s53
      %s55 = sshll.u32 [#allocation8], 4
      %s56 = int_to_ptr.vmem [resolvable:$true] %s55
      %61 = dma.hbm_to_vmem [thread:$0]  %s54, 768, %s56, [#allocation9], 64, 64, 4
    $region17: #{tpu_custom_call.1} parent=1 // pred_fallthru
      _
    // Predicated region
    $region18: #{tpu_custom_call.1} parent=1 // pred_check
      _
    $region19: #{tpu_custom_call.1} parent=1 // pred_check_branch
      %63 = sbr.rel (0) target = $region21
    $region20: #{tpu_custom_call.1} parent=1 // pred_region
      _
    $region21: #{tpu_custom_call.1} parent=1 // pred_fallthru
      _
    // Predicated region
    $region22: #{tpu_custom_call.1} parent=1 // pred_check
      _
    $region23: #{tpu_custom_call.1} parent=1 // pred_check_branch
      %65 = sbr.rel (0) target = $region25
    $region24: #{tpu_custom_call.1} parent=1 // pred_region
      %67 = dma.done [#allocation3], 128
    $region25: #{tpu_custom_call.1} parent=1 // pred_fallthru
      _
    // Predicated region
    $region26: #{tpu_custom_call.1} parent=1 // pred_check
      _
    $region27: #{tpu_custom_call.1} parent=1 // pred_check_branch
      %69 = sbr.rel (0) target = $region29
    $region28: #{tpu_custom_call.1} parent=1 // pred_region
      %71 = dma.done [#allocation6], 128
    $region29: #{tpu_custom_call.1} parent=1 // pred_fallthru
      _
    // Predicated region
    $region30: #{tpu_custom_call.1} parent=1 // pred_check
      _
    $region31: #{tpu_custom_call.1} parent=1 // pred_check_branch
      %73 = sbr.rel (0) target = $region33
    $region32: #{tpu_custom_call.1} parent=1 // pred_region
      %75 = dma.done [#allocation6], 768
    $region33: #{tpu_custom_call.1} parent=1 // pred_fallthru
      _
    // Predicated region
    $region34: #{tpu_custom_call.1} parent=1 // pred_check
      _
    $region35: #{tpu_custom_call.1} parent=1 // pred_check_branch
      %77 = sbr.rel (0) target = $region37
    $region36: #{tpu_custom_call.1} parent=1 // pred_region
      %79 = dma.done [#allocation9], 768
    $region37: #{tpu_custom_call.1} parent=1 // pred_fallthru
      _
    %v81 = vld [vmem:[#allocation2] sm:$0xff]
    %v82 = vpack.c.bf16 %v81, %v81
    %v83 = vld [vmem:[#allocation5] sm:$0xff]
    %v84 = vpack.c.bf16 %v83, %v83
    %v85 = vld [vmem:[#allocation7] sm:$0xf]
    %v86 = vld [vmem:[#allocation7 + $0x4] sm:$0xf]
    %v87 = vld [vmem:[#allocation7 + $0x8] sm:$0xf]
    %v88 = vld [vmem:[#allocation7 + $0xc] sm:$0xf]
    %v89 = vld [vmem:[#allocation8] sm:$0xf]
    %v90 = vld [vmem:[#allocation8 + $0x4] sm:$0xf]
    %v91 = vld [vmem:[#allocation8 + $0x8] sm:$0xf]
    %v92 = vld [vmem:[#allocation8 + $0xc] sm:$0xf]
    %v97 = vunpack.c.l.b16 %v89
    %v98 = vunpack.c.l.b16 %v90
    %v99 = vunpack.c.l.b16 %v91
    %v100 = vunpack.c.l.b16 %v92
    %v101 = vpack.c.b16 %v98, %v97
    %v102 = vpack.c.b16 %v100, %v99
    %vm105 = vcmask 261120
    %v107 = vsel %vm105, %v84, 0
    %109 = vmatpush.bf16.msra.mxu0 0
    %110 = vmatpush.bf16.msra.mxu0 0
    %111 = vmatpush.bf16.msra.mxu0 0
    %112 = vmatpush.bf16.msra.mxu0 0
    %113 = vmatpush.bf16.msra.mxu0 0
    %114 = vmatpush.bf16.msra.mxu0 0
    %115 = vmatpush.bf16.msra.mxu0 %v102
    %116 = vmatpush.bf16.msra.mxu0 %v101
    %117 = vmatmul.bf16.gmra.mxu0 %v107
    %v118 = vpop.f32.mrf.mxu0
    %v119 = vadd.f32 0.0, %v118
    %v120 = vpop.f32.mrf.mxu0
    %121 = vdwg.mxu0
    %v126 = vunpack.c.l.b16 %v85
    %v127 = vunpack.c.l.b16 %v86
    %v128 = vunpack.c.l.b16 %v87
    %v129 = vunpack.c.l.b16 %v88
    %v130 = vpack.c.b16 %v127, %v126
    %v131 = vpack.c.b16 %v129, %v128
    %v135 = vsel %vm105, %v82, 0
    %137 = vmatpush.bf16.msra.mxu0 0
    %138 = vmatpush.bf16.msra.mxu0 0
    %139 = vmatpush.bf16.msra.mxu0 0
    %140 = vmatpush.bf16.msra.mxu0 0
    %141 = vmatpush.bf16.msra.mxu0 0
    %142 = vmatpush.bf16.msra.mxu0 0
    %143 = vmatpush.bf16.msra.mxu0 %v131
    %144 = vmatpush.bf16.msra.mxu0 %v130
    %145 = vmatmul.bf16.gmra.mxu0 %v135
    %v146 = vpop.f32.mrf.mxu0
    %v147 = vadd.f32 %v119, %v146
    %v148 = vpop.f32.mrf.mxu0
    %149 = vdwg.mxu0
    %v150 = vld [vmem:[%s4] sm:$0x1]
    %v152 = vperm.slane %v150, 0
    %v154 = vadd.f32 %v147, %v152
    %v155 = vmul.f32 %v154, 0.5
    %v156 = vtanh.pop %v155
    %v157 = vmul.f32 %v156, 0.5
    %v158 = vadd.f32 %v157, 0.5
    %s159 = scalar_lea.vmem [#allocation7], 16
    %v160 = vld [vmem:[%s159] sm:$0xf]
    %v161 = vld [vmem:[%s159 + $0x4] sm:$0xf]
    %v162 = vld [vmem:[%s159 + $0x8] sm:$0xf]
    %v163 = vld [vmem:[%s159 + $0xc] sm:$0xf]
    %s164 = scalar_lea.vmem [#allocation8], 16
    %v165 = vld [vmem:[%s164] sm:$0xf]
    %v166 = vld [vmem:[%s164 + $0x4] sm:$0xf]
    %v167 = vld [vmem:[%s164 + $0x8] sm:$0xf]
    %v168 = vld [vmem:[%s164 + $0xc] sm:$0xf]
    %v173 = vunpack.c.l.b16 %v165
    %v174 = vunpack.c.l.b16 %v166
    %v175 = vunpack.c.l.b16 %v167
    %v176 = vunpack.c.l.b16 %v168
    %v177 = vpack.c.b16 %v174, %v173
    %v178 = vpack.c.b16 %v176, %v175
    %181 = vmatpush.bf16.msra.mxu0 0
    %182 = vmatpush.bf16.msra.mxu0 0
    %183 = vmatpush.bf16.msra.mxu0 0
    %184 = vmatpush.bf16.msra.mxu0 0
    %185 = vmatpush.bf16.msra.mxu0 0
    %186 = vmatpush.bf16.msra.mxu0 0
    %187 = vmatpush.bf16.msra.mxu0 %v178
    %188 = vmatpush.bf16.msra.mxu0 %v177
    %189 = vmatmul.bf16.gmra.mxu0 %v107
    %v190 = vpop.f32.mrf.mxu0
    %v191 = vadd.f32 0.0, %v190
    %v192 = vpop.f32.mrf.mxu0
    %193 = vdwg.mxu0
    %v198 = vunpack.c.l.b16 %v160
    %v199 = vunpack.c.l.b16 %v161
    %v200 = vunpack.c.l.b16 %v162
    %v201 = vunpack.c.l.b16 %v163
    %v202 = vpack.c.b16 %v199, %v198
    %v203 = vpack.c.b16 %v201, %v200
    %206 = vmatpush.bf16.msra.mxu0 0
    %207 = vmatpush.bf16.msra.mxu0 0
    %208 = vmatpush.bf16.msra.mxu0 0
    %209 = vmatpush.bf16.msra.mxu0 0
    %210 = vmatpush.bf16.msra.mxu0 0
    %211 = vmatpush.bf16.msra.mxu0 0
    %212 = vmatpush.bf16.msra.mxu0 %v203
    %213 = vmatpush.bf16.msra.mxu0 %v202
    %214 = vmatmul.bf16.gmra.mxu0 %v135
    %v215 = vpop.f32.mrf.mxu0
    %v216 = vadd.f32 %v191, %v215
    %v217 = vpop.f32.mrf.mxu0
    %218 = vdwg.mxu0
    %s219 = scalar_lea.vmem %s4, 1
    %v220 = vld [vmem:[%s219] sm:$0x1]
    %v222 = vperm.slane %v220, 0
    %v224 = vadd.f32 %v216, %v222
    %v225 = vmul.f32 %v224, 0.5
    %v226 = vtanh.pop %v225
    %v227 = vmul.f32 %v226, 0.5
    %v228 = vadd.f32 %v227, 0.5
    %s229 = scalar_lea.vmem [#allocation7], 32
    %v230 = vld [vmem:[%s229] sm:$0xf]
    %v231 = vld [vmem:[%s229 + $0x4] sm:$0xf]
    %v232 = vld [vmem:[%s229 + $0x8] sm:$0xf]
    %v233 = vld [vmem:[%s229 + $0xc] sm:$0xf]
    %s234 = scalar_lea.vmem [#allocation8], 32
    %v235 = vld [vmem:[%s234] sm:$0xf]
    %v236 = vld [vmem:[%s234 + $0x4] sm:$0xf]
    %v237 = vld [vmem:[%s234 + $0x8] sm:$0xf]
    %v238 = vld [vmem:[%s234 + $0xc] sm:$0xf]
    %v243 = vunpack.c.l.b16 %v235
    %v244 = vunpack.c.l.b16 %v236
    %v245 = vunpack.c.l.b16 %v237
    %v246 = vunpack.c.l.b16 %v238
    %v247 = vpack.c.b16 %v244, %v243
    %v248 = vpack.c.b16 %v246, %v245
    %251 = vmatpush.bf16.msra.mxu0 0
    %252 = vmatpush.bf16.msra.mxu0 0
    %253 = vmatpush.bf16.msra.mxu0 0
    %254 = vmatpush.bf16.msra.mxu0 0
    %255 = vmatpush.bf16.msra.mxu0 0
    %256 = vmatpush.bf16.msra.mxu0 0
    %257 = vmatpush.bf16.msra.mxu0 %v248
    %258 = vmatpush.bf16.msra.mxu0 %v247
    %259 = vmatmul.bf16.gmra.mxu0 %v107
    %v260 = vpop.f32.mrf.mxu0
    %v261 = vadd.f32 0.0, %v260
    %v262 = vpop.f32.mrf.mxu0
    %263 = vdwg.mxu0
    %v268 = vunpack.c.l.b16 %v230
    %v269 = vunpack.c.l.b16 %v231
    %v270 = vunpack.c.l.b16 %v232
    %v271 = vunpack.c.l.b16 %v233
    %v272 = vpack.c.b16 %v269, %v268
    %v273 = vpack.c.b16 %v271, %v270
    %276 = vmatpush.bf16.msra.mxu0 0
    %277 = vmatpush.bf16.msra.mxu0 0
    %278 = vmatpush.bf16.msra.mxu0 0
    %279 = vmatpush.bf16.msra.mxu0 0
    %280 = vmatpush.bf16.msra.mxu0 0
    %281 = vmatpush.bf16.msra.mxu0 0
    %282 = vmatpush.bf16.msra.mxu0 %v273
    %283 = vmatpush.bf16.msra.mxu0 %v272
    %284 = vmatmul.bf16.gmra.mxu0 %v135
    %v285 = vpop.f32.mrf.mxu0
    %v286 = vadd.f32 %v261, %v285
    %v287 = vpop.f32.mrf.mxu0
    %288 = vdwg.mxu0
    %s289 = scalar_lea.vmem %s4, 2
    %v290 = vld [vmem:[%s289] sm:$0x1]
    %v292 = vperm.slane %v290, 0
    %v294 = vadd.f32 %v286, %v292
    %v295 = vtanh.pop %v294
    %v296 = vmul.f32 %v81, %v158
    %v297 = vmul.f32 %v228, %v295
    %v298 = vadd.f32 %v296, %v297
    %v299 = vtanh.pop %v298
    %300 = vst.msk [vmem:[#allocation10] sm:$0xff] %vm105, %v299
    // Predicated region
    $region38: #{tpu_custom_call.1} parent=1 // pred_check
      _
    $region39: #{tpu_custom_call.1} parent=1 // pred_check_branch
      %302 = sbr.rel (0) target = $region41
    $region40: #{tpu_custom_call.1} parent=1 // pred_region
      %304 = vsyncadd [#allocation4], 0
      %s306 = sshll.u32 [#allocation10], 4
      %s307 = int_to_ptr.vmem [resolvable:$true] %s306
      %s308 = sshll.u32 %s5, 4
      %s309 = int_to_ptr.hbm [resolvable:$true] %s308
      %311 = dma.vmem_to_hbm [thread:$0]  %s307, 128, %s309, [#allocation4]
    $region41: #{tpu_custom_call.1} parent=1 // pred_fallthru
      _
    // Predicated region
    $region42: #{tpu_custom_call.1} parent=1 // pred_check
      _
    $region43: #{tpu_custom_call.1} parent=1 // pred_check_branch
      %313 = sbr.rel (0) target = $region45
    $region44: #{tpu_custom_call.1} parent=1 // pred_region
      %315 = dma.done [#allocation4], 128
    $region45: #{tpu_custom_call.1} parent=1 // pred_fallthru
      _
    %316 = vsyncpa [#allocation3], 1
    %317 = vsyncpa [#allocation6], 1
    %318 = vsyncpa [#allocation9], 1
    %319 = vsyncpa [#allocation4], 1

// kernel: tpu_custom_call.1
$region0: #{tpu_custom_call.1}
  #allocation0 [shape = 'u32[]', space=smem, size = 0x4, offset = 0x4, fixed_abs, tag = 'smem constant byte address 0x4 - core index']
  #allocation1 [shape = 'u32[72,128]{1,0:T(1,128)}', space=vmem, size = 0x9000, scoped, tag = 'internal scratch']
  %s0 = inlined_call_operand.hbm [shape: f32[8,32], index: 0, kind: input, shape index: {}]
  %s1 = inlined_call_operand.hbm [shape: f32[8,32], index: 1, kind: input, shape index: {}]
  %s2 = inlined_call_operand.hbm [shape: bf16[3,32,32], index: 2, kind: input, shape index: {}]
  %s3 = inlined_call_operand.hbm [shape: bf16[3,32,32], index: 3, kind: input, shape index: {}]
  %s4 = inlined_call_operand.vmem [shape: f32[3,1,32], index: 4, kind: input, shape index: {}]
  %s5 = inlined_call_operand.hbm [shape: f32[8,32], index: 5, kind: output, shape index: {}]
  %s6 = sld [smem:[#allocation0]]
  $region46: #{tpu_custom_call.1} parent=0
    _
  %s8 = ssub.s32 1, %s6
  %s9 = scalar_select 0, %s8, %s6
  $region1: #{tpu_custom_call.1} parent=0
    #allocation2 [shape = 'u8[4096]{0}', space=vmem, size = 0x1000, scoped, tag = 'input window, operand 0, single buffered']
    #allocation3 [shape = 's32[1]{0}', space=sflag, size = 0x4, scoped, tag = 'scoped memory for tpu_custom_call.1']
    #allocation4 [shape = 's32[1]{0}', space=sflag, size = 0x4, scoped, tag = 'scoped memory for tpu_custom_call.1']
    #allocation5 [shape = 'u8[4096]{0}', space=vmem, size = 0x1000, scoped, tag = 'input window, operand 1, single buffered']
    #allocation6 [shape = 's32[1]{0}', space=sflag, size = 0x4, scoped, tag = 'scoped memory for tpu_custom_call.1']
    #allocation7 [shape = 'u8[24576]{0}', space=vmem, size = 0x6000, scoped, tag = 'input window, operand 2, single buffered']
    #allocation8 [shape = 'u8[24576]{0}', space=vmem, size = 0x6000, scoped, tag = 'input window, operand 3, single buffered']
    #allocation9 [shape = 's32[1]{0}', space=sflag, size = 0x4, scoped, tag = 'scoped memory for tpu_custom_call.1']
    #allocation10 [shape = 'u8[4096]{0}', space=vmem, size = 0x1000, scoped, tag = 'output window, operand 0, single buffered']
    %10 = vsyncpa [#allocation3], 0
    %11 = vsyncpa [#allocation6], 0
    %12 = vsyncpa [#allocation9], 0
    %13 = vsyncpa [#allocation4], 0
    // Predicated region
    $region2: #{tpu_custom_call.1} parent=1 // pred_check
      _
    $region3: #{tpu_custom_call.1} parent=1 // pred_check_branch
      %15 = sbr.rel (0) target = $region5
    $region4: #{tpu_custom_call.1} parent=1 // pred_region
      %17 = vsyncadd [#allocation3], 0
      %s19 = sshll.u32 %s0, 4
      %s20 = int_to_ptr.hbm [resolvable:$true] %s19
      %s21 = sshll.u32 [#allocation2], 4
      %s22 = int_to_ptr.vmem [resolvable:$true] %s21
      %24 = dma.hbm_to_vmem [thread:$0]  %s20, 128, %s22, [#allocation3]
    $region5: #{tpu_custom_call.1} parent=1 // pred_fallthru
      _
    // Predicated region
    $region6: #{tpu_custom_call.1} parent=1 // pred_check
      _
    $region7: #{tpu_custom_call.1} parent=1 // pred_check_branch
      %26 = sbr.rel (0) target = $region9
    $region8: #{tpu_custom_call.1} parent=1 // pred_region
      %28 = vsyncadd [#allocation6], 0
      %s30 = sshll.u32 %s1, 4
      %s31 = int_to_ptr.hbm [resolvable:$true] %s30
      %s32 = sshll.u32 [#allocation5], 4
      %s33 = int_to_ptr.vmem [resolvable:$true] %s32
      %35 = dma.hbm_to_vmem [thread:$0]  %s31, 128, %s33, [#allocation6]
    $region9: #{tpu_custom_call.1} parent=1 // pred_fallthru
      _
    // Predicated region
    $region10: #{tpu_custom_call.1} parent=1 // pred_check
      _
    $region11: #{tpu_custom_call.1} parent=1 // pred_check_branch
      %37 = sbr.rel (0) target = $region13
    $region12: #{tpu_custom_call.1} parent=1 // pred_region
      %39 = vsyncadd [#allocation6], 0
      %s40 = sshll.u32 %s2, 4
      %s41 = int_to_ptr.hbm [resolvable:$true] %s40
      %s42 = sshll.u32 [#allocation7], 4
      %s43 = int_to_ptr.vmem [resolvable:$true] %s42
      %48 = dma.hbm_to_vmem [thread:$0]  %s41, 768, %s43, [#allocation6], 64, 64, 4
    $region13: #{tpu_custom_call.1} parent=1 // pred_fallthru
      _
    // Predicated region
    $region14: #{tpu_custom_call.1} parent=1 // pred_check
      _
    $region15: #{tpu_custom_call.1} parent=1 // pred_check_branch
      %50 = sbr.rel (0) target = $region17
    $region16: #{tpu_custom_call.1} parent=1 // pred_region
      %52 = vsyncadd [#allocation9], 0
      %s53 = sshll.u32 %s3, 4
      %s54 = int_to_ptr.hbm [resolvable:$true] %s53
      %s55 = sshll.u32 [#allocation8], 4
      %s56 = int_to_ptr.vmem [resolvable:$true] %s55
      %61 = dma.hbm_to_vmem [thread:$0]  %s54, 768, %s56, [#allocation9], 64, 64, 4
    $region17: #{tpu_custom_call.1} parent=1 // pred_fallthru
      _
    // Predicated region
    $region18: #{tpu_custom_call.1} parent=1 // pred_check
      _
    $region19: #{tpu_custom_call.1} parent=1 // pred_check_branch
      %63 = sbr.rel (0) target = $region21
    $region20: #{tpu_custom_call.1} parent=1 // pred_region
      _
    $region21: #{tpu_custom_call.1} parent=1 // pred_fallthru
      _
    // Predicated region
    $region22: #{tpu_custom_call.1} parent=1 // pred_check
      _
    $region23: #{tpu_custom_call.1} parent=1 // pred_check_branch
      %65 = sbr.rel (0) target = $region25
    $region24: #{tpu_custom_call.1} parent=1 // pred_region
      %67 = dma.done [#allocation3], 128
    $region25: #{tpu_custom_call.1} parent=1 // pred_fallthru
      _
    // Predicated region
    $region26: #{tpu_custom_call.1} parent=1 // pred_check
      _
    $region27: #{tpu_custom_call.1} parent=1 // pred_check_branch
      %69 = sbr.rel (0) target = $region29
    $region28: #{tpu_custom_call.1} parent=1 // pred_region
      %71 = dma.done [#allocation6], 128
    $region29: #{tpu_custom_call.1} parent=1 // pred_fallthru
      _
    // Predicated region
    $region30: #{tpu_custom_call.1} parent=1 // pred_check
      _
    $region31: #{tpu_custom_call.1} parent=1 // pred_check_branch
      %73 = sbr.rel (0) target = $region33
    $region32: #{tpu_custom_call.1} parent=1 // pred_region
      %75 = dma.done [#allocation6], 768
    $region33: #{tpu_custom_call.1} parent=1 // pred_fallthru
      _
    // Predicated region
    $region34: #{tpu_custom_call.1} parent=1 // pred_check
      _
    $region35: #{tpu_custom_call.1} parent=1 // pred_check_branch
      %77 = sbr.rel (0) target = $region37
    $region36: #{tpu_custom_call.1} parent=1 // pred_region
      %79 = dma.done [#allocation9], 768
    $region37: #{tpu_custom_call.1} parent=1 // pred_fallthru
      _
    %v81 = vld [vmem:[#allocation2] sm:$0xff]
    %v82 = vpack.c.bf16 %v81, %v81
    %v83 = vld [vmem:[#allocation5] sm:$0xff]
    %v84 = vpack.c.bf16 %v83, %v83
    %v85 = vld [vmem:[#allocation7] sm:$0xf]
    %v86 = vld [vmem:[#allocation7 + $0x4] sm:$0xf]
    %v87 = vld [vmem:[#allocation7 + $0x8] sm:$0xf]
    %v88 = vld [vmem:[#allocation7 + $0xc] sm:$0xf]
    %v89 = vld [vmem:[#allocation8] sm:$0xf]
    %v90 = vld [vmem:[#allocation8 + $0x4] sm:$0xf]
    %v91 = vld [vmem:[#allocation8 + $0x8] sm:$0xf]
    %v92 = vld [vmem:[#allocation8 + $0xc] sm:$0xf]
    %v97 = vunpack.c.l.b16 %v89
    %v98 = vunpack.c.l.b16 %v90
    %v99 = vunpack.c.l.b16 %v91
    %v100 = vunpack.c.l.b16 %v92
    %v101 = vpack.c.b16 %v98, %v97
    %v102 = vpack.c.b16 %v100, %v99
    %vm105 = vcmask 261120
    %v107 = vsel %vm105, %v84, 0
    %109 = vmatpush.bf16.msra.mxu0 0
    %110 = vmatpush.bf16.msra.mxu0 0
    %111 = vmatpush.bf16.msra.mxu0 0
    %112 = vmatpush.bf16.msra.mxu0 0
    %113 = vmatpush.bf16.msra.mxu0 0
    %114 = vmatpush.bf16.msra.mxu0 0
    %115 = vmatpush.bf16.msra.mxu0 %v102
    %116 = vmatpush.bf16.msra.mxu0 %v101
    %117 = vmatmul.bf16.gmra.mxu0 %v107
    %v118 = vpop.f32.mrf.mxu0
    %v119 = vadd.f32 0.0, %v118
    %v120 = vpop.f32.mrf.mxu0
    %121 = vdwg.mxu0
    %v126 = vunpack.c.l.b16 %v85
    %v127 = vunpack.c.l.b16 %v86
    %v128 = vunpack.c.l.b16 %v87
    %v129 = vunpack.c.l.b16 %v88
    %v130 = vpack.c.b16 %v127, %v126
    %v131 = vpack.c.b16 %v129, %v128
    %v135 = vsel %vm105, %v82, 0
    %137 = vmatpush.bf16.msra.mxu0 0
    %138 = vmatpush.bf16.msra.mxu0 0
    %139 = vmatpush.bf16.msra.mxu0 0
    %140 = vmatpush.bf16.msra.mxu0 0
    %141 = vmatpush.bf16.msra.mxu0 0
    %142 = vmatpush.bf16.msra.mxu0 0
    %143 = vmatpush.bf16.msra.mxu0 %v131
    %144 = vmatpush.bf16.msra.mxu0 %v130
    %145 = vmatmul.bf16.gmra.mxu0 %v135
    %v146 = vpop.f32.mrf.mxu0
    %v147 = vadd.f32 %v119, %v146
    %v148 = vpop.f32.mrf.mxu0
    %149 = vdwg.mxu0
    %v150 = vld [vmem:[%s4] sm:$0x1]
    %v152 = vperm.slane %v150, 0
    %v154 = vadd.f32 %v147, %v152
    %v155 = vmul.f32 %v154, 0.5
    %v156 = vtanh.pop %v155
    %v157 = vmul.f32 %v156, 0.5
    %v158 = vadd.f32 %v157, 0.5
    %s159 = scalar_lea.vmem [#allocation7], 16
    %v160 = vld [vmem:[%s159] sm:$0xf]
    %v161 = vld [vmem:[%s159 + $0x4] sm:$0xf]
    %v162 = vld [vmem:[%s159 + $0x8] sm:$0xf]
    %v163 = vld [vmem:[%s159 + $0xc] sm:$0xf]
    %s164 = scalar_lea.vmem [#allocation8], 16
    %v165 = vld [vmem:[%s164] sm:$0xf]
    %v166 = vld [vmem:[%s164 + $0x4] sm:$0xf]
    %v167 = vld [vmem:[%s164 + $0x8] sm:$0xf]
    %v168 = vld [vmem:[%s164 + $0xc] sm:$0xf]
    %v173 = vunpack.c.l.b16 %v165
    %v174 = vunpack.c.l.b16 %v166
    %v175 = vunpack.c.l.b16 %v167
    %v176 = vunpack.c.l.b16 %v168
    %v177 = vpack.c.b16 %v174, %v173
    %v178 = vpack.c.b16 %v176, %v175
    %181 = vmatpush.bf16.msra.mxu0 0
    %182 = vmatpush.bf16.msra.mxu0 0
    %183 = vmatpush.bf16.msra.mxu0 0
    %184 = vmatpush.bf16.msra.mxu0 0
    %185 = vmatpush.bf16.msra.mxu0 0
    %186 = vmatpush.bf16.msra.mxu0 0
    %187 = vmatpush.bf16.msra.mxu0 %v178
    %188 = vmatpush.bf16.msra.mxu0 %v177
    %189 = vmatmul.bf16.gmra.mxu0 %v107
    %v190 = vpop.f32.mrf.mxu0
    %v191 = vadd.f32 0.0, %v190
    %v192 = vpop.f32.mrf.mxu0
    %193 = vdwg.mxu0
    %v198 = vunpack.c.l.b16 %v160
    %v199 = vunpack.c.l.b16 %v161
    %v200 = vunpack.c.l.b16 %v162
    %v201 = vunpack.c.l.b16 %v163
    %v202 = vpack.c.b16 %v199, %v198
    %v203 = vpack.c.b16 %v201, %v200
    %206 = vmatpush.bf16.msra.mxu0 0
    %207 = vmatpush.bf16.msra.mxu0 0
    %208 = vmatpush.bf16.msra.mxu0 0
    %209 = vmatpush.bf16.msra.mxu0 0
    %210 = vmatpush.bf16.msra.mxu0 0
    %211 = vmatpush.bf16.msra.mxu0 0
    %212 = vmatpush.bf16.msra.mxu0 %v203
    %213 = vmatpush.bf16.msra.mxu0 %v202
    %214 = vmatmul.bf16.gmra.mxu0 %v135
    %v215 = vpop.f32.mrf.mxu0
    %v216 = vadd.f32 %v191, %v215
    %v217 = vpop.f32.mrf.mxu0
    %218 = vdwg.mxu0
    %s219 = scalar_lea.vmem %s4, 1
    %v220 = vld [vmem:[%s219] sm:$0x1]
    %v222 = vperm.slane %v220, 0
    %v224 = vadd.f32 %v216, %v222
    %v225 = vmul.f32 %v224, 0.5
    %v226 = vtanh.pop %v225
    %v227 = vmul.f32 %v226, 0.5
    %v228 = vadd.f32 %v227, 0.5
    %s229 = scalar_lea.vmem [#allocation7], 32
    %v230 = vld [vmem:[%s229] sm:$0xf]
    %v231 = vld [vmem:[%s229 + $0x4] sm:$0xf]
    %v232 = vld [vmem:[%s229 + $0x8] sm:$0xf]
    %v233 = vld [vmem:[%s229 + $0xc] sm:$0xf]
    %s234 = scalar_lea.vmem [#allocation8], 32
    %v235 = vld [vmem:[%s234] sm:$0xf]
    %v236 = vld [vmem:[%s234 + $0x4] sm:$0xf]
    %v237 = vld [vmem:[%s234 + $0x8] sm:$0xf]
    %v238 = vld [vmem:[%s234 + $0xc] sm:$0xf]
    %v243 = vunpack.c.l.b16 %v235
    %v244 = vunpack.c.l.b16 %v236
    %v245 = vunpack.c.l.b16 %v237
    %v246 = vunpack.c.l.b16 %v238
    %v247 = vpack.c.b16 %v244, %v243
    %v248 = vpack.c.b16 %v246, %v245
    %251 = vmatpush.bf16.msra.mxu0 0
    %252 = vmatpush.bf16.msra.mxu0 0
    %253 = vmatpush.bf16.msra.mxu0 0
    %254 = vmatpush.bf16.msra.mxu0 0
    %255 = vmatpush.bf16.msra.mxu0 0
    %256 = vmatpush.bf16.msra.mxu0 0
    %257 = vmatpush.bf16.msra.mxu0 %v248
    %258 = vmatpush.bf16.msra.mxu0 %v247
    %259 = vmatmul.bf16.gmra.mxu0 %v107
    %v260 = vpop.f32.mrf.mxu0
    %v261 = vadd.f32 0.0, %v260
    %v262 = vpop.f32.mrf.mxu0
    %263 = vdwg.mxu0
    %v268 = vunpack.c.l.b16 %v230
    %v269 = vunpack.c.l.b16 %v231
    %v270 = vunpack.c.l.b16 %v232
    %v271 = vunpack.c.l.b16 %v233
    %v272 = vpack.c.b16 %v269, %v268
    %v273 = vpack.c.b16 %v271, %v270
    %276 = vmatpush.bf16.msra.mxu0 0
    %277 = vmatpush.bf16.msra.mxu0 0
    %278 = vmatpush.bf16.msra.mxu0 0
    %279 = vmatpush.bf16.msra.mxu0 0
    %280 = vmatpush.bf16.msra.mxu0 0
    %281 = vmatpush.bf16.msra.mxu0 0
    %282 = vmatpush.bf16.msra.mxu0 %v273
    %283 = vmatpush.bf16.msra.mxu0 %v272
    %284 = vmatmul.bf16.gmra.mxu0 %v135
    %v285 = vpop.f32.mrf.mxu0
    %v286 = vadd.f32 %v261, %v285
    %v287 = vpop.f32.mrf.mxu0
    %288 = vdwg.mxu0
    %s289 = scalar_lea.vmem %s4, 2
    %v290 = vld [vmem:[%s289] sm:$0x1]
    %v292 = vperm.slane %v290, 0
    %v294 = vadd.f32 %v286, %v292
    %v295 = vtanh.pop %v294
    %v296 = vmul.f32 %v81, %v158
    %v297 = vmul.f32 %v228, %v295
    %v298 = vadd.f32 %v296, %v297
    %v299 = vtanh.pop %v298
    %300 = vst.msk [vmem:[#allocation10] sm:$0xff] %vm105, %v299
    // Predicated region
    $region38: #{tpu_custom_call.1} parent=1 // pred_check
      _
    $region39: #{tpu_custom_call.1} parent=1 // pred_check_branch
      %302 = sbr.rel (0) target = $region41
    $region40: #{tpu_custom_call.1} parent=1 // pred_region
      %304 = vsyncadd [#allocation4], 0
      %s306 = sshll.u32 [#allocation10], 4
      %s307 = int_to_ptr.vmem [resolvable:$true] %s306
      %s308 = sshll.u32 %s5, 4
      %s309 = int_to_ptr.hbm [resolvable:$true] %s308
      %311 = dma.vmem_to_hbm [thread:$0]  %s307, 128, %s309, [#allocation4]
    $region41: #{tpu_custom_call.1} parent=1 // pred_fallthru
      _
    // Predicated region
    $region42: #{tpu_custom_call.1} parent=1 // pred_check
      _
    $region43: #{tpu_custom_call.1} parent=1 // pred_check_branch
      %313 = sbr.rel (0) target = $region45
    $region44: #{tpu_custom_call.1} parent=1 // pred_region
      %315 = dma.done [#allocation4], 128
    $region45: #{tpu_custom_call.1} parent=1 // pred_fallthru
      _
    %316 = vsyncpa [#allocation3], 1
    %317 = vsyncpa [#allocation6], 1
    %318 = vsyncpa [#allocation9], 1
    %319 = vsyncpa [#allocation4], 1

</llo_original>
